<compile_context>
chip_gen: v5e
topology: v5e:2x2
jax: 0.10.0
libtpu: 0.0.40
codegen_flags: <defaults>
</compile_context>

<pallas_src>
import jax
import jax.numpy as jnp
from jax.experimental import pallas as pl
from jax.experimental.pallas import tpu as pltpu

NUM_OPS = 4

# Operation pool (fuzzy / soft logic binary ops) as coefficients of
#   out = c0 + c1*(a+b) + c2*(a*b)
#   0: AND  -> a*b       : (0, 0,  1)
#   1: OR   -> a+b-ab    : (0, 1, -1)
#   2: XOR  -> a+b-2ab   : (0, 1, -2)
#   3: NAND -> 1-ab      : (1, 0, -1)
_OP_COEFFS = jnp.array(
    [[0.0, 0.0, 0.0, 1.0],      # c0 per op
     [0.0, 1.0, 1.0, 0.0],      # c1 per op
     [1.0, -1.0, -2.0, -1.0]],  # c2 per op
    dtype=jnp.float32)           # [3, NUM_OPS]


def _round_up(x, m):
    return (x + m - 1) // m * m


def _choose_tile(dim, base, target):
    """Largest multiple-of-`base` tile <= target whose padding waste is <= ~25% of dim."""
    t = min(target, _round_up(dim, base))
    while t > base:
        waste = _round_up(dim, t) - dim
        if waste * 4 <= dim or waste < base:
            break
        t = max(base, (t // 2) // base * base)
    return t


def _vmem_capacity_bytes():
    try:
        cap = getattr(pltpu.get_tpu_info(), "vmem_capacity_bytes", None)
        if cap:
            return int(cap)
    except Exception:
        pass
    return 64 * 1024 * 1024  # conservative default (v7x per-TensorCore VMEM)


def _logic_layer_kernel(sym_ref, g1_ref, g2_ref, c_ref, o_ref):
    # sym:   [bt, N_in_pad] resident symbol-pool slab for this batch tile
    # g1/g2: [N_in_pad, nt] one-hot gather matrices (column n selects idx_k[n])
    # c:     [8, nt]        rows 0..2 = (c0, c1, c2) per node; rows 3..7 padding
    # o:     [bt, nt]
    sym = sym_ref[...]
    a = jnp.dot(sym, g1_ref[...], preferred_element_type=jnp.float32)
    b = jnp.dot(sym, g2_ref[...], preferred_element_type=jnp.float32)
    out = c_ref[0:1, :] + c_ref[1:2, :] * (a + b) + c_ref[2:3, :] * (a * b)
    o_ref[...] = out.astype(o_ref.dtype)


def _jax_fallback_forward(symbol_pool, idx1, idx2, op_idx):
    a = jnp.take(symbol_pool, idx1, axis=1)
    b = jnp.take(symbol_pool, idx2, axis=1)
    c = _OP_COEFFS.astype(symbol_pool.dtype)[:, op_idx]
    return c[0][None, :] + c[1][None, :] * (a + b) + c[2][None, :] * (a * b)


def logic_layer_forward(symbol_pool, idx1, idx2, op_idx, *, allow_jax_fast_path=True):
    """Pallas forward of LogicLayer.

    symbol_pool: [B, N_in] float32
    idx1, idx2:  [N_out]   int32 (per-node input indices, fixed at init)
    op_idx:      [N_out]   int32 (per-node sampled operation index)
    returns:     [B, N_out] float32
    """
    B, N_in = symbol_pool.shape
    N_out = int(idx1.shape[0])
    dt = symbol_pool.dtype
    itemsize = jnp.dtype(dt).itemsize

    # Tiny problems: pallas_call dispatch + pad copies dominate; plain XLA fusion wins.
    if allow_jax_fast_path and B * N_out * itemsize < (1 << 20):
        return _jax_fallback_forward(symbol_pool, idx1, idx2, op_idx)

    # ---------------- generation-aware tile / VMEM sizing ----------------
    N_in_pad = _round_up(N_in, 128)
    bt = _choose_tile(B, 8, 512)
    nt = _choose_tile(N_out, 128, 2048)

    vmem_cap = _vmem_capacity_bytes()
    budget = int(vmem_cap * 0.65)  # target for the double-buffered working set

    def footprint(bt_, nt_):
        # 5 streams (sym, g1, g2, coeff, out), each double-buffered by the pipeline.
        return 2 * itemsize * (bt_ * N_in_pad + 2 * N_in_pad * nt_ + 8 * nt_ + bt_ * nt_)

    while footprint(bt, nt) > budget and (bt > 8 or nt > 128):
        shrink_nt = nt > 128 and (nt * (2 * N_in_pad + bt) >= bt * N_in_pad or bt <= 8)
        if shrink_nt:
            nt = max(128, (nt // 2) // 128 * 128)
        else:
            bt = max(8, (bt // 2) // 8 * 8)

    if footprint(bt, nt) > vmem_cap:
        # Symbol pool too wide for the fused-gather kernel to fit in VMEM.
        # TODO(synk): add an N_in-tiled (accumulator) variant for very large pools.
        return _jax_fallback_forward(symbol_pool, idx1, idx2, op_idx)

    B_pad = _round_up(B, bt)
    N_pad = _round_up(N_out, nt)

    # ---------------- small-operand padding only ----------------
    sym = symbol_pool
    if (B_pad, N_in_pad) != (B, N_in):
        sym = jnp.pad(sym, ((0, B_pad - B), (0, N_in_pad - N_in)))

    # One-hot gather matrices; padded node slots get index -1 -> all-zero column.
    idx1_p = jnp.full((N_pad,), -1, jnp.int32).at[:N_out].set(idx1.astype(jnp.int32))
    idx2_p = jnp.full((N_pad,), -1, jnp.int32).at[:N_out].set(idx2.astype(jnp.int32))
    rows = jnp.arange(N_in_pad, dtype=jnp.int32)[:, None]
    g1 = (rows == idx1_p[None, :]).astype(dt)                       # [N_in_pad, N_pad]
    g2 = (rows == idx2_p[None, :]).astype(dt)                       # [N_in_pad, N_pad]
    coeff = jnp.zeros((8, N_pad), dt).at[:3, :N_out].set(
        _OP_COEFFS.astype(dt)[:, op_idx])                           # [8, N_pad]

    grid_b = B_pad // bt
    grid_n = N_pad // nt

    # Node axis leading keeps the large g1/g2/coeff blocks resident across the inner
    # batch loop and (on v7x) puts the axis with the most blocks on the sharded leading
    # dimension.  If the node axis collapses to one block, lead with batch instead.
    node_leading = not (grid_n == 1 and grid_b > 1)
    if node_leading:
        grid = (grid_n, grid_b)
        sym_spec = pl.BlockSpec((bt, N_in_pad), lambda j, i: (i, 0))
        g_spec = pl.BlockSpec((N_in_pad, nt), lambda j, i: (0, j))
        c_spec = pl.BlockSpec((8, nt), lambda j, i: (0, j))
        o_spec = pl.BlockSpec((bt, nt), lambda j, i: (i, j))
    else:
        grid = (grid_b, grid_n)
        sym_spec = pl.BlockSpec((bt, N_in_pad), lambda i, j: (i, 0))
        g_spec = pl.BlockSpec((N_in_pad, nt), lambda i, j: (0, j))
        c_spec = pl.BlockSpec((8, nt), lambda i, j: (0, j))
        o_spec = pl.BlockSpec((bt, nt), lambda i, j: (i, j))

    vmem_limit = int(min(vmem_cap * 0.75,
                         max(32 * 1024 * 1024, footprint(bt, nt) + (8 << 20))))

    cost = pl.CostEstimate(
        flops=4 * B_pad * N_in_pad * N_pad + 6 * B_pad * N_pad,
        transcendentals=0,
        bytes_accessed=(B_pad * N_in_pad + 2 * N_in_pad * N_pad + 8 * N_pad
                        + B_pad * N_pad) * itemsize,
    )

    out = pl.pallas_call(
        _logic_layer_kernel,
        out_shape=jax.ShapeDtypeStruct((B_pad, N_pad), dt),
        grid=grid,
        in_specs=[sym_spec, g_spec, g_spec, c_spec],
        out_specs=o_spec,
        compiler_params=pltpu.CompilerParams(
            dimension_semantics=("parallel", "parallel"),
            vmem_limit_bytes=vmem_limit,
        ),
        cost_estimate=cost,
    )(sym, g1, g2, coeff)

    return out[:B, :N_out]


def _reference_forward(symbol_pool, idx1, idx2, op_idx):
    # Pure-JAX reference matching the PyTorch loop-over-nodes semantics.
    a = symbol_pool[:, idx1]  # [B, N_out]
    b = symbol_pool[:, idx2]
    ops = jnp.stack([a * b,
                     a + b - a * b,
                     a + b - 2.0 * a * b,
                     1.0 - a * b], axis=0)  # [NUM_OPS, B, N_out]
    return jnp.take_along_axis(ops, op_idx[None, None, :], axis=0)[0]


if __name__ == "__main__":
    key = jax.random.PRNGKey(0)
    k_x, k_i1, k_i2, k_op = jax.random.split(key, 4)

    # Small shapes consistent with the module: node_num_i=16 input symbols,
    # node_num=32 logic nodes, batch=8.
    B, N_in, N_out = 8, 16, 32

    # Symbol pool values (fuzzy truth values in [0, 1]).
    symbol_pool = jax.random.uniform(k_x, (B, N_in), dtype=jnp.float32)

    # Deterministic "parameter"/config init mirroring LogicNode.__init__:
    #   index_1, index_2 ~ randint(node_num_i); logits = zeros -> uniform Categorical.
    idx1 = jax.random.randint(k_i1, (N_out,), 0, N_in, dtype=jnp.int32)
    idx2 = jax.random.randint(k_i2, (N_out,), 0, N_in, dtype=jnp.int32)
    logits = jnp.zeros((N_out, NUM_OPS), dtype=jnp.float32)  # Parameter(zeros(len(pool)))
    op_idx = jax.random.categorical(k_op, logits, axis=-1).astype(jnp.int32)  # sample_path

    # Force the Pallas path (the demo shapes would otherwise take the tiny-problem
    # plain-JAX fast path).
    out = logic_layer_forward(symbol_pool, idx1, idx2, op_idx, allow_jax_fast_path=False)
    out = jax.block_until_ready(out)

    ref = _reference_forward(symbol_pool, idx1, idx2, op_idx)
    assert out.shape == (B, N_out)
    assert jnp.allclose(out, ref, atol=1e-5, rtol=1e-5)

    print("KERNEL_OK")
</pallas_src>

<mosaic_0001>
module attributes {stable_mosaic.version = 11 : i64} {
  func.func @_logic_layer_kernel(%arg0: i32, %arg1: i32, %arg2: memref<8x128xf32, #tpu.memory_space<vmem>>, %arg3: memref<128x128xf32, #tpu.memory_space<vmem>>, %arg4: memref<128x128xf32, #tpu.memory_space<vmem>>, %arg5: memref<8x128xf32, #tpu.memory_space<vmem>>, %arg6: memref<8x128xf32, #tpu.memory_space<vmem>>) attributes {dimension_semantics = [#tpu.dimension_semantics<parallel>, #tpu.dimension_semantics<parallel>], iteration_bounds = array<i64: 1, 1>, scalar_prefetch = 0 : i64, scratch_operands = 0 : i64, tpu.core_type = #tpu.core_type<tc>, window_params = [{transform_indices = @transform_0, window_bounds = array<i64: 8, 128>}, {transform_indices = @transform_1, window_bounds = array<i64: 128, 128>}, {transform_indices = @transform_2, window_bounds = array<i64: 128, 128>}, {transform_indices = @transform_3, window_bounds = array<i64: 8, 128>}, {transform_indices = @transform_4, window_bounds = array<i64: 8, 128>}]} {
    %c0 = arith.constant 0 : index
    %c0_0 = arith.constant 0 : index
    %0 = vector.load %arg2[%c0, %c0_0] : memref<8x128xf32, #tpu.memory_space<vmem>>, vector<8x128xf32>
    %c0_1 = arith.constant 0 : index
    %c0_2 = arith.constant 0 : index
    %1 = vector.load %arg3[%c0_1, %c0_2] : memref<128x128xf32, #tpu.memory_space<vmem>>, vector<128x128xf32>
    %cst = arith.constant dense<0.000000e+00> : vector<8x128xf32>
    %2 = tpu.matmul %0, %1, %cst {dimension_numbers = #tpu.dot_dimension_numbers<[1], [0], [0], [1], [0, 0, 1, 1], [], []>} : vector<8x128xf32>, vector<128x128xf32>, vector<8x128xf32> -> vector<8x128xf32>
    %c0_3 = arith.constant 0 : index
    %c0_4 = arith.constant 0 : index
    %3 = vector.load %arg4[%c0_3, %c0_4] : memref<128x128xf32, #tpu.memory_space<vmem>>, vector<128x128xf32>
    %cst_5 = arith.constant dense<0.000000e+00> : vector<8x128xf32>
    %4 = tpu.matmul %0, %3, %cst_5 {dimension_numbers = #tpu.dot_dimension_numbers<[1], [0], [0], [1], [0, 0, 1, 1], [], []>} : vector<8x128xf32>, vector<128x128xf32>, vector<8x128xf32> -> vector<8x128xf32>
    %c0_6 = arith.constant 0 : index
    %c0_7 = arith.constant 0 : index
    %5 = vector.load %arg5[%c0_6, %c0_7] : memref<8x128xf32, #tpu.memory_space<vmem>>, vector<1x128xf32>
    %c1 = arith.constant 1 : index
    %c0_8 = arith.constant 0 : index
    %6 = vector.load %arg5[%c1, %c0_8] : memref<8x128xf32, #tpu.memory_space<vmem>>, vector<1x128xf32>
    %7 = arith.addf %2, %4 : vector<8x128xf32>
    %8 = vector.broadcast %6 : vector<1x128xf32> to vector<8x128xf32>
    %9 = arith.mulf %8, %7 : vector<8x128xf32>
    %10 = vector.broadcast %5 : vector<1x128xf32> to vector<8x128xf32>
    %11 = arith.addf %10, %9 : vector<8x128xf32>
    %c2 = arith.constant 2 : index
    %c0_9 = arith.constant 0 : index
    %12 = vector.load %arg5[%c2, %c0_9] : memref<8x128xf32, #tpu.memory_space<vmem>>, vector<1x128xf32>
    %13 = arith.mulf %2, %4 : vector<8x128xf32>
    %14 = vector.broadcast %12 : vector<1x128xf32> to vector<8x128xf32>
    %15 = arith.mulf %14, %13 : vector<8x128xf32>
    %16 = arith.addf %11, %15 : vector<8x128xf32>
    %c0_10 = arith.constant 0 : index
    %c0_11 = arith.constant 0 : index
    %17 = vector.load %arg6[%c0_10, %c0_11] : memref<8x128xf32, #tpu.memory_space<vmem>>, vector<8x128xf32>
    tpu.vector_store %arg6[%c0_10, %c0_11], %16 {strides = array<i32>} : memref<8x128xf32, #tpu.memory_space<vmem>>, vector<8x128xf32>,
    return
  }
  func.func @transform_0(%arg0: i32, %arg1: i32) -> (i32, i32) {
    %c0_i32 = arith.constant 0 : i32
    %c0_i32_0 = arith.constant 0 : i32
    return %arg1, %c0_i32 : i32, i32
  }
  func.func @transform_1(%arg0: i32, %arg1: i32) -> (i32, i32) {
    %c0_i32 = arith.constant 0 : i32
    %c0_i32_0 = arith.constant 0 : i32
    return %c0_i32, %arg0 : i32, i32
  }
  func.func @transform_2(%arg0: i32, %arg1: i32) -> (i32, i32) {
    %c0_i32 = arith.constant 0 : i32
    %c0_i32_0 = arith.constant 0 : i32
    return %c0_i32, %arg0 : i32, i32
  }
  func.func @transform_3(%arg0: i32, %arg1: i32) -> (i32, i32) {
    %c0_i32 = arith.constant 0 : i32
    %c0_i32_0 = arith.constant 0 : i32
    return %c0_i32, %arg0 : i32, i32
  }
  func.func @transform_4(%arg0: i32, %arg1: i32) -> (i32, i32) {
    %c0_i32 = arith.constant 0 : i32
    return %arg1, %arg0 : i32, i32
  }
}

</mosaic_0001>

<llo_original>
// kernel: tpu_custom_call.1
$region0: #{tpu_custom_call.1}
  #allocation0 [shape = 'u32[]', space=smem, size = 0x4, offset = 0x4, fixed_abs, tag = 'smem constant byte address 0x4 - core index']
  #allocation1 [shape = 'u32[72,128]{1,0:T(1,128)}', space=vmem, size = 0x9000, scoped, tag = 'internal scratch']
  %s0 = inlined_call_operand.hbm [shape: f32[8,128], index: 0, kind: input, shape index: {}]
  %s1 = inlined_call_operand.hbm [shape: f32[128,128], index: 1, kind: input, shape index: {}]
  %s2 = inlined_call_operand.hbm [shape: f32[128,128], index: 2, kind: input, shape index: {}]
  %s3 = inlined_call_operand.hbm [shape: f32[8,128], index: 3, kind: input, shape index: {}]
  %s4 = inlined_call_operand.hbm [shape: f32[8,128], index: 4, kind: output, shape index: {}]
  %s5 = sld [smem:[#allocation0]]
  $region42: #{tpu_custom_call.1} parent=0
    _
  %s7 = ssub.s32 1, %s5
  %s8 = scalar_select 0, %s7, %s5
  $region1: #{tpu_custom_call.1} parent=0
    #allocation2 [shape = 'u8[4096]{0}', space=vmem, size = 0x1000, scoped, tag = 'input window, operand 0, single buffered']
    #allocation3 [shape = 's32[1]{0}', space=sflag, size = 0x4, scoped, tag = 'scoped memory for tpu_custom_call.1']
    #allocation4 [shape = 's32[1]{0}', space=sflag, size = 0x4, scoped, tag = 'scoped memory for tpu_custom_call.1']
    #allocation5 [shape = 'u8[65536]{0}', space=vmem, size = 0x10000, scoped, tag = 'input window, operand 1, single buffered']
    #allocation6 [shape = 's32[1]{0}', space=sflag, size = 0x4, scoped, tag = 'scoped memory for tpu_custom_call.1']
    #allocation7 [shape = 'u8[65536]{0}', space=vmem, size = 0x10000, scoped, tag = 'input window, operand 2, single buffered']
    #allocation8 [shape = 'u8[4096]{0}', space=vmem, size = 0x1000, scoped, tag = 'input window, operand 3, single buffered']
    #allocation9 [shape = 's32[1]{0}', space=sflag, size = 0x4, scoped, tag = 'scoped memory for tpu_custom_call.1']
    #allocation10 [shape = 'u8[4096]{0}', space=vmem, size = 0x1000, scoped, tag = 'output window, operand 0, single buffered']
    %9 = vsyncpa [#allocation3], 0
    %10 = vsyncpa [#allocation6], 0
    %11 = vsyncpa [#allocation9], 0
    %12 = vsyncpa [#allocation4], 0
    // Predicated region
    $region2: #{tpu_custom_call.1} parent=1 // pred_check
      _
    $region3: #{tpu_custom_call.1} parent=1 // pred_check_branch
      %14 = sbr.rel (0) target = $region5
    $region4: #{tpu_custom_call.1} parent=1 // pred_region
      %16 = vsyncadd [#allocation3], 0
      %s18 = sshll.u32 %s0, 4
      %s19 = int_to_ptr.hbm [resolvable:$true] %s18
      %s20 = sshll.u32 [#allocation2], 4
      %s21 = int_to_ptr.vmem [resolvable:$true] %s20
      %23 = dma.hbm_to_vmem [thread:$0]  %s19, 128, %s21, [#allocation3]
    $region5: #{tpu_custom_call.1} parent=1 // pred_fallthru
      _
    // Predicated region
    $region6: #{tpu_custom_call.1} parent=1 // pred_check
      _
    $region7: #{tpu_custom_call.1} parent=1 // pred_check_branch
      %25 = sbr.rel (0) target = $region9
    $region8: #{tpu_custom_call.1} parent=1 // pred_region
      %27 = vsyncadd [#allocation6], 0
      %s28 = sshll.u32 %s1, 4
      %s29 = int_to_ptr.hbm [resolvable:$true] %s28
      %s30 = sshll.u32 [#allocation5], 4
      %s31 = int_to_ptr.vmem [resolvable:$true] %s30
      %36 = dma.hbm_to_vmem [thread:$0]  %s29, 2048, %s31, [#allocation6], 128, 128, 8
    $region9: #{tpu_custom_call.1} parent=1 // pred_fallthru
      _
    // Predicated region
    $region10: #{tpu_custom_call.1} parent=1 // pred_check
      _
    $region11: #{tpu_custom_call.1} parent=1 // pred_check_branch
      %38 = sbr.rel (0) target = $region13
    $region12: #{tpu_custom_call.1} parent=1 // pred_region
      %40 = vsyncadd [#allocation6], 0
      %s41 = sshll.u32 %s2, 4
      %s42 = int_to_ptr.hbm [resolvable:$true] %s41
      %s43 = sshll.u32 [#allocation7], 4
      %s44 = int_to_ptr.vmem [resolvable:$true] %s43
      %49 = dma.hbm_to_vmem [thread:$0]  %s42, 2048, %s44, [#allocation6], 128, 128, 8
    $region13: #{tpu_custom_call.1} parent=1 // pred_fallthru
      _
    // Predicated region
    $region14: #{tpu_custom_call.1} parent=1 // pred_check
      _
    $region15: #{tpu_custom_call.1} parent=1 // pred_check_branch
      %51 = sbr.rel (0) target = $region17
    $region16: #{tpu_custom_call.1} parent=1 // pred_region
      %53 = vsyncadd [#allocation9], 0
      %s55 = sshll.u32 %s3, 4
      %s56 = int_to_ptr.hbm [resolvable:$true] %s55
      %s57 = sshll.u32 [#allocation8], 4
      %s58 = int_to_ptr.vmem [resolvable:$true] %s57
      %60 = dma.hbm_to_vmem [thread:$0]  %s56, 128, %s58, [#allocation9]
    $region17: #{tpu_custom_call.1} parent=1 // pred_fallthru
      _
    // Predicated region
    $region18: #{tpu_custom_call.1} parent=1 // pred_check
      _
    $region19: #{tpu_custom_call.1} parent=1 // pred_check_branch
      %62 = sbr.rel (0) target = $region21
    $region20: #{tpu_custom_call.1} parent=1 // pred_region
      %64 = dma.done [#allocation3], 128
    $region21: #{tpu_custom_call.1} parent=1 // pred_fallthru
      _
    // Predicated region
    $region22: #{tpu_custom_call.1} parent=1 // pred_check
      _
    $region23: #{tpu_custom_call.1} parent=1 // pred_check_branch
      %66 = sbr.rel (0) target = $region25
    $region24: #{tpu_custom_call.1} parent=1 // pred_region
      %68 = dma.done [#allocation6], 2048
    $region25: #{tpu_custom_call.1} parent=1 // pred_fallthru
      _
    // Predicated region
    $region26: #{tpu_custom_call.1} parent=1 // pred_check
      _
    $region27: #{tpu_custom_call.1} parent=1 // pred_check_branch
      %70 = sbr.rel (0) target = $region29
    $region28: #{tpu_custom_call.1} parent=1 // pred_region
      %72 = dma.done [#allocation6], 2048
    $region29: #{tpu_custom_call.1} parent=1 // pred_fallthru
      _
    // Predicated region
    $region30: #{tpu_custom_call.1} parent=1 // pred_check
      _
    $region31: #{tpu_custom_call.1} parent=1 // pred_check_branch
      %74 = sbr.rel (0) target = $region33
    $region32: #{tpu_custom_call.1} parent=1 // pred_region
      %76 = dma.done [#allocation9], 128
    $region33: #{tpu_custom_call.1} parent=1 // pred_fallthru
      _
    %v77 = vld [vmem:[#allocation2] sm:$0xff]
    %v78 = vld [vmem:[#allocation5] sm:$0xff]
    %v79 = vld [vmem:[#allocation5 + $0x8] sm:$0xff]
    %v80 = vld [vmem:[#allocation5 + $0x10] sm:$0xff]
    %v81 = vld [vmem:[#allocation5 + $0x18] sm:$0xff]
    %v82 = vld [vmem:[#allocation5 + $0x20] sm:$0xff]
    %v83 = vld [vmem:[#allocation5 + $0x28] sm:$0xff]
    %v84 = vld [vmem:[#allocation5 + $0x30] sm:$0xff]
    %v85 = vld [vmem:[#allocation5 + $0x38] sm:$0xff]
    %v86 = vld [vmem:[#allocation5 + $0x40] sm:$0xff]
    %v87 = vld [vmem:[#allocation5 + $0x48] sm:$0xff]
    %v88 = vld [vmem:[#allocation5 + $0x50] sm:$0xff]
    %v89 = vld [vmem:[#allocation5 + $0x58] sm:$0xff]
    %v90 = vld [vmem:[#allocation5 + $0x60] sm:$0xff]
    %v91 = vld [vmem:[#allocation5 + $0x68] sm:$0xff]
    %v92 = vld [vmem:[#allocation5 + $0x70] sm:$0xff]
    %v93 = vld [vmem:[#allocation5 + $0x78] sm:$0xff]
    %94 = vmatpush.msra.mxu0 %v93
    %95 = vmatpush.msra.mxu0 %v92
    %96 = vmatpush.msra.mxu0 %v91
    %97 = vmatpush.msra.mxu0 %v90
    %98 = vmatpush.msra.mxu0 %v89
    %99 = vmatpush.msra.mxu0 %v88
    %100 = vmatpush.msra.mxu0 %v87
    %101 = vmatpush.msra.mxu0 %v86
    %102 = vmatpush.msra.mxu0 %v85
    %103 = vmatpush.msra.mxu0 %v84
    %104 = vmatpush.msra.mxu0 %v83
    %105 = vmatpush.msra.mxu0 %v82
    %106 = vmatpush.msra.mxu0 %v81
    %107 = vmatpush.msra.mxu0 %v80
    %108 = vmatpush.msra.mxu0 %v79
    %109 = vmatpush.msra.mxu0 %v78
    %110 = vmatmul.f32.gmra.mxu0 %v77
    %v111 = vpop.f32.mrf.mxu0
    %v112 = vadd.f32 0.0, %v111
    %113 = vdwg.mxu0
    %v114 = vld [vmem:[#allocation7] sm:$0xff]
    %v115 = vld [vmem:[#allocation7 + $0x8] sm:$0xff]
    %v116 = vld [vmem:[#allocation7 + $0x10] sm:$0xff]
    %v117 = vld [vmem:[#allocation7 + $0x18] sm:$0xff]
    %v118 = vld [vmem:[#allocation7 + $0x20] sm:$0xff]
    %v119 = vld [vmem:[#allocation7 + $0x28] sm:$0xff]
    %v120 = vld [vmem:[#allocation7 + $0x30] sm:$0xff]
    %v121 = vld [vmem:[#allocation7 + $0x38] sm:$0xff]
    %v122 = vld [vmem:[#allocation7 + $0x40] sm:$0xff]
    %v123 = vld [vmem:[#allocation7 + $0x48] sm:$0xff]
    %v124 = vld [vmem:[#allocation7 + $0x50] sm:$0xff]
    %v125 = vld [vmem:[#allocation7 + $0x58] sm:$0xff]
    %v126 = vld [vmem:[#allocation7 + $0x60] sm:$0xff]
    %v127 = vld [vmem:[#allocation7 + $0x68] sm:$0xff]
    %v128 = vld [vmem:[#allocation7 + $0x70] sm:$0xff]
    %v129 = vld [vmem:[#allocation7 + $0x78] sm:$0xff]
    %130 = vmatpush.msra.mxu0 %v129
    %131 = vmatpush.msra.mxu0 %v128
    %132 = vmatpush.msra.mxu0 %v127
    %133 = vmatpush.msra.mxu0 %v126
    %134 = vmatpush.msra.mxu0 %v125
    %135 = vmatpush.msra.mxu0 %v124
    %136 = vmatpush.msra.mxu0 %v123
    %137 = vmatpush.msra.mxu0 %v122
    %138 = vmatpush.msra.mxu0 %v121
    %139 = vmatpush.msra.mxu0 %v120
    %140 = vmatpush.msra.mxu0 %v119
    %141 = vmatpush.msra.mxu0 %v118
    %142 = vmatpush.msra.mxu0 %v117
    %143 = vmatpush.msra.mxu0 %v116
    %144 = vmatpush.msra.mxu0 %v115
    %145 = vmatpush.msra.mxu0 %v114
    %146 = vmatmul.f32.gmra.mxu0 %v77
    %v147 = vpop.f32.mrf.mxu0
    %v148 = vadd.f32 0.0, %v147
    %149 = vdwg.mxu0
    %v150 = vld [vmem:[#allocation8] sm:$0x1]
    %v151 = vld [vmem:[#allocation8 + $0x1] sm:$0x1]
    %v152 = vadd.f32 %v112, %v148
    %v153 = vperm.slane %v151, 0
    %v154 = vmul.f32 %v153, %v152
    %v155 = vperm.slane %v150, 0
    %v156 = vadd.f32 %v155, %v154
    %v157 = vld [vmem:[#allocation8 + $0x2] sm:$0x1]
    %v158 = vmul.f32 %v112, %v148
    %v159 = vperm.slane %v157, 0
    %v160 = vmul.f32 %v159, %v158
    %v161 = vadd.f32 %v156, %v160
    %162 = vst [vmem:[#allocation10] sm:$0xff] %v161
    // Predicated region
    $region34: #{tpu_custom_call.1} parent=1 // pred_check
      _
    $region35: #{tpu_custom_call.1} parent=1 // pred_check_branch
      %164 = sbr.rel (0) target = $region37
    $region36: #{tpu_custom_call.1} parent=1 // pred_region
      %166 = vsyncadd [#allocation4], 0
      %s168 = sshll.u32 [#allocation10], 4
      %s169 = int_to_ptr.vmem [resolvable:$true] %s168
      %s170 = sshll.u32 %s4, 4
      %s171 = int_to_ptr.hbm [resolvable:$true] %s170
      %173 = dma.vmem_to_hbm [thread:$0]  %s169, 128, %s171, [#allocation4]
    $region37: #{tpu_custom_call.1} parent=1 // pred_fallthru
      _
    // Predicated region
    $region38: #{tpu_custom_call.1} parent=1 // pred_check
      _
    $region39: #{tpu_custom_call.1} parent=1 // pred_check_branch
      %175 = sbr.rel (0) target = $region41
    $region40: #{tpu_custom_call.1} parent=1 // pred_region
      %177 = dma.done [#allocation4], 128
    $region41: #{tpu_custom_call.1} parent=1 // pred_fallthru
      _
    %178 = vsyncpa [#allocation3], 1
    %179 = vsyncpa [#allocation6], 1
    %180 = vsyncpa [#allocation9], 1
    %181 = vsyncpa [#allocation4], 1

</llo_original>
